<compile_context>
chip_gen: v5e
topology: v5e:2x2
jax: 0.10.0
libtpu: 0.0.40
codegen_flags: <defaults>
</compile_context>

<pallas_src>
import functools

import jax
import jax.numpy as jnp
from jax import lax
from jax.experimental import pallas as pl
from jax.experimental.pallas import tpu as pltpu


# ----------------------------- configuration --------------------------------
STATE_DIM = 4
AUGMENT_DIM = STATE_DIM * 2
TOTAL_DIM = STATE_DIM + AUGMENT_DIM            # 12
IN_DIM = TOTAL_DIM + 1                         # 13 (z concat t)
HIDDEN_DIM = 32
MAX_NORM = 5.0                                 # dynamics_max_norm > 0 exercises the norm path


def _round_up(x, m):
    return ((x + m - 1) // m) * m


def _cdiv(a, b):
    return -(-a // b)


# --------------------------- shared MLP body ---------------------------------
def _mlp_dz(z, first_bias, w1z, w2, b2, w3, b3, w4, b4, max_norm, *,
            transposed, compute_dtype):
    """dz = net(concat([z, t])) with W1's time column folded into `first_bias`.

    transposed=False : z is [B, F] (batch on sublanes)  -> x @ W
    transposed=True  : z is [F, B] (batch on lanes)     -> W^T @ x (lane-dense)
    All matmuls accumulate in f32 on the MXU.
    """
    if transposed:
        def mm(x, w):
            return jnp.dot(w.astype(compute_dtype), x.astype(compute_dtype),
                           preferred_element_type=jnp.float32)
        axis = 0
    else:
        def mm(x, w):
            return jnp.dot(x.astype(compute_dtype), w.astype(compute_dtype),
                           preferred_element_type=jnp.float32)
        axis = -1

    h = jnp.maximum(mm(z, w1z) + first_bias, 0.0)
    h = jnp.maximum(mm(h, w2) + b2, 0.0)
    h = jnp.maximum(mm(h, w3) + b3, 0.0)
    dz = mm(h, w4) + b4
    if max_norm > 0.0:
        nrm = jnp.sqrt(jnp.sum(dz * dz, axis=axis, keepdims=True))
        # divide via the (otherwise idle) EUP; epsilon semantics match reference
        inv = pl.reciprocal(nrm + 1e-6, approx=True)
        dz = dz * jnp.minimum(jnp.ones_like(nrm), max_norm * inv)
    return dz


# ----------------------- single dynamics-eval kernels -------------------------
def _forward_scalar_t_kernel(max_norm, t_ref, z_ref, w1z_ref, w1t_ref, b1_ref,
                             w2_ref, b2_ref, w3_ref, b3_ref, w4_ref, b4_ref,
                             o_ref):
    t = t_ref[0]                                           # SMEM scalar
    first_bias = t * w1t_ref[...] + b1_ref[...]            # [1, H]
    o_ref[...] = _mlp_dz(z_ref[...], first_bias, w1z_ref[...],
                         w2_ref[...], b2_ref[...], w3_ref[...], b3_ref[...],
                         w4_ref[...], b4_ref[...], max_norm,
                         transposed=False, compute_dtype=jnp.float32)


def _forward_vector_t_kernel(max_norm, t_ref, z_ref, w1z_ref, w1t_ref, b1_ref,
                             w2_ref, b2_ref, w3_ref, b3_ref, w4_ref, b4_ref,
                             o_ref):
    first_bias = t_ref[...] * w1t_ref[...] + b1_ref[...]   # [B,1]*[1,H] -> [B,H]
    o_ref[...] = _mlp_dz(z_ref[...], first_bias, w1z_ref[...],
                         w2_ref[...], b2_ref[...], w3_ref[...], b3_ref[...],
                         w4_ref[...], b4_ref[...], max_norm,
                         transposed=False, compute_dtype=jnp.float32)


def augmented_node_forward(t, z, params, max_norm=MAX_NORM):
    """Pallas-backed dynamics fn: dz/dt = net(concat([z, t])) + norm clip.

    Matches the PyTorch module's forward(). t: scalar, [B] or [B,1];
    z: [B, TOTAL_DIM] float32.  Scalar t is passed through SMEM (no HBM array).
    """
    b, d = z.shape
    z = z.astype(jnp.float32)
    (w1, b1), (w2, b2), (w3, b3), (w4, b4) = params
    w1z, w1t = w1[:d], w1[d:d + 1]                         # [D,H], [1,H]
    t = jnp.asarray(t, dtype=jnp.float32)

    vmem = pl.BlockSpec(memory_space=pltpu.MemorySpace.VMEM)
    smem = pl.BlockSpec(memory_space=pltpu.MemorySpace.SMEM)

    if t.ndim == 0:
        t_arr = t.reshape(1)
        kernel = functools.partial(_forward_scalar_t_kernel, float(max_norm))
        t_spec = smem
    else:
        t_arr = (t if t.ndim == 2 else t[:, None]).astype(jnp.float32)
        kernel = functools.partial(_forward_vector_t_kernel, float(max_norm))
        t_spec = vmem

    return pl.pallas_call(
        kernel,
        out_shape=jax.ShapeDtypeStruct((b, d), jnp.float32),
        in_specs=[t_spec] + [vmem] * 10,
        out_specs=vmem,
    )(t_arr, z, w1z, w1t, b1, w2, b2, w3, b3, w4, b4)


# ------------------------- fused RK4 integration kernel -----------------------
def _rk4_chunk_kernel(max_norm, t_chunk, transposed, compute_dtype,
                      ts_ref, z0_ref, w1z_ref, w1t_ref, b1_ref,
                      w2_ref, b2_ref, w3_ref, b3_ref, w4_ref, b4_ref,
                      traj_ref, z_carry):
    c = pl.program_id(1)                        # time-chunk axis ("arbitrary", innermost)

    @pl.when(c == 0)
    def _():                                    # new batch block: load initial state
        z_carry[...] = z0_ref[...]

    # Weights are VMEM-resident (constant index_map); load once per grid step.
    w1z = w1z_ref[...]
    w1t = w1t_ref[...]
    b1 = b1_ref[...]
    w2 = w2_ref[...]
    b2 = b2_ref[...]
    w3 = w3_ref[...]
    b3 = b3_ref[...]
    w4 = w4_ref[...]
    b4 = b4_ref[...]

    def f(t, z):
        return _mlp_dz(z, t * w1t + b1, w1z, w2, b2, w3, b3, w4, b4, max_norm,
                       transposed=transposed, compute_dtype=compute_dtype)

    base = c * t_chunk

    def body(s, z):
        step = base + s
        t0 = ts_ref[step]                       # SMEM scalar reads
        t1 = ts_ref[step + 1]
        dt = t1 - t0
        half = 0.5 * dt
        # Incremental combine keeps at most one k live alongside the accumulator
        # (lower vreg pressure than holding k1..k4 until the end).
        k = f(t0, z)
        acc = z + (dt * (1.0 / 6.0)) * k
        k = f(t0 + half, z + half * k)
        acc = acc + (dt * (1.0 / 3.0)) * k
        k = f(t0 + half, z + half * k)
        acc = acc + (dt * (1.0 / 3.0)) * k
        k = f(t1, z + dt * k)
        z_new = acc + (dt * (1.0 / 6.0)) * k
        traj_ref[s] = z_new                     # store z_{step+1} into the chunk block
        return z_new

    z_final = lax.fori_loop(0, t_chunk, body, z_carry[...])
    z_carry[...] = z_final


def integrate_rk4(z0, t_span, params, max_norm=MAX_NORM, *,
                  batch_block=None, t_chunk=None, layout=None,
                  use_bf16=False, return_all=True):
    """Fixed-step classic RK4 over t_span, fully fused in one pallas_call.

    z0: [B, TOTAL_DIM]; t_span: [n_steps+1]. Returns [n_steps+1, B, TOTAL_DIM]
    (or the final state if return_all=False).
    """
    B, D = z0.shape
    n_steps = int(t_span.shape[0]) - 1
    assert n_steps >= 1

    # lane-dense [features, batch] layout for large batches (default heuristic)
    transposed = (layout == "DB") if layout is not None else (B >= 128)

    (w1, b1), (w2, b2), (w3, b3), (w4, b4) = params
    w1z, w1t = w1[:D], w1[D:D + 1]
    H = w2.shape[0]

    # ---- time chunking: several RK4 steps per grid point -----------------------
    if t_chunk is None:
        t_chunk = min(64, n_steps)
    n_chunks = _cdiv(n_steps, t_chunk)
    t_chunk = _cdiv(n_steps, n_chunks)          # rebalance to minimise padded steps
    n_total = n_chunks * t_chunk
    pad_steps = n_total - n_steps
    ts = t_span.astype(jnp.float32)
    if pad_steps:
        # padded steps have dt == 0 -> z unchanged; rows are sliced off afterwards
        ts = jnp.concatenate([ts, jnp.broadcast_to(ts[-1], (pad_steps,))])

    # ---- batch blocking ---------------------------------------------------------
    if transposed:
        align = 128                              # batch on lanes
        if batch_block is None:
            base_b = _cdiv(B, 2) if B >= 256 else B   # >=2 blocks for v7x megacore
            batch_block = min(1024, _round_up(base_b, align))
    else:
        align = 8                                # batch on sublanes
        if batch_block is None:
            batch_block = min(256, _round_up(B, align))   # cap for vreg pressure
    batch_block = _round_up(batch_block, align)
    Bp = _round_up(B, batch_block)
    nb = Bp // batch_block

    z0f = z0.astype(jnp.float32)
    if Bp != B:
        z0f = jnp.concatenate([z0f, jnp.zeros((Bp - B, D), jnp.float32)], axis=0)

    compute_dtype = jnp.bfloat16 if use_bf16 else jnp.float32
    wcast = (lambda w: w.astype(jnp.bfloat16)) if use_bf16 else (lambda w: w)

    if transposed:
        z0k = z0f.T                                                  # [D, Bp]
        w1z_k, w1t_k, b1_k = wcast(w1z.T), w1t.T, b1.T               # [H,D],[H,1],[H,1]
        w2_k, b2_k = wcast(w2.T), b2.T
        w3_k, b3_k = wcast(w3.T), b3.T
        w4_k, b4_k = wcast(w4.T), b4.T                               # [D,H],[D,1]
        state_block = (D, batch_block)
        z0_spec = pl.BlockSpec((D, batch_block), lambda bblk, c: (0, bblk))
        out_block = (t_chunk, D, batch_block)
        out_spec = pl.BlockSpec(out_block, lambda bblk, c: (c, 0, bblk))
        out_shape = jax.ShapeDtypeStruct((n_total, D, Bp), jnp.float32)
    else:
        z0k = z0f                                                    # [Bp, D]
        w1z_k, w1t_k, b1_k = wcast(w1z), w1t, b1
        w2_k, b2_k = wcast(w2), b2
        w3_k, b3_k = wcast(w3), b3
        w4_k, b4_k = wcast(w4), b4
        state_block = (batch_block, D)
        z0_spec = pl.BlockSpec((batch_block, D), lambda bblk, c: (bblk, 0))
        out_block = (t_chunk, batch_block, D)
        out_spec = pl.BlockSpec(out_block, lambda bblk, c: (c, bblk, 0))
        out_shape = jax.ShapeDtypeStruct((n_total, Bp, D), jnp.float32)

    def _const_spec(arr):
        return pl.BlockSpec(arr.shape, lambda bblk, c: (0, 0))

    # Advisory cost estimate so XLA schedules around a long-running call.
    flops = int(4 * 2 * (D * H + 2 * H * H + H * D) * Bp * n_total)
    weight_bytes = 4 * ((D + 1) * H + 2 * H * H + H * D + 3 * H + D)
    cost = pl.CostEstimate(
        flops=flops,
        transcendentals=int(8 * Bp * n_total),
        bytes_accessed=int(4 * (Bp * D * (n_total + 1) + (n_total + 1)) + weight_bytes),
    )

    out_block_bytes = 4
    for s in out_block:
        out_block_bytes *= s
    vmem_need = (2 * out_block_bytes                     # double-buffered traj block
                 + 3 * 4 * batch_block * D               # z0 block (x2) + z_carry
                 + 2 * 2 * weight_bytes                  # weights (conservative)
                 + (2 << 20))                            # headroom
    vmem_limit = int(min(max(vmem_need, 16 * 1024 * 1024), 64 * 1024 * 1024))

    grid_spec = pltpu.PrefetchScalarGridSpec(
        num_scalar_prefetch=0,
        grid=(nb, n_chunks),
        in_specs=[
            pl.BlockSpec(memory_space=pltpu.MemorySpace.SMEM),       # padded t_span
            z0_spec,
            _const_spec(w1z_k), _const_spec(w1t_k), _const_spec(b1_k),
            _const_spec(w2_k), _const_spec(b2_k),
            _const_spec(w3_k), _const_spec(b3_k),
            _const_spec(w4_k), _const_spec(b4_k),
        ],
        out_specs=out_spec,
        scratch_shapes=[pltpu.VMEM(state_block, jnp.float32)],       # z carry
    )

    traj = pl.pallas_call(
        functools.partial(_rk4_chunk_kernel, float(max_norm), int(t_chunk),
                          bool(transposed), compute_dtype),
        out_shape=out_shape,
        grid_spec=grid_spec,
        compiler_params=pltpu.CompilerParams(
            dimension_semantics=("parallel", "arbitrary"),
            vmem_limit_bytes=vmem_limit),
        cost_estimate=cost,
    )(ts, z0k, w1z_k, w1t_k, b1_k, w2_k, b2_k, w3_k, b3_k, w4_k, b4_k)

    if transposed:
        traj = jnp.transpose(traj[:n_steps, :, :B], (0, 2, 1))       # -> [T, B, D]
    else:
        traj = traj[:n_steps, :B]

    if return_all:
        return jnp.concatenate([z0.astype(jnp.float32)[None], traj], axis=0)
    return traj[-1]


def integrate(x0, t_span, params, max_norm=MAX_NORM, return_all=True, **kw):
    """Mirror of the module's integrate(): augment -> RK4 -> project to state_dim."""
    z0 = jnp.concatenate(
        [x0, jnp.zeros((x0.shape[0], AUGMENT_DIM), x0.dtype)], axis=-1)
    z_traj = integrate_rk4(z0, t_span, params, max_norm=max_norm,
                           return_all=True, **kw)
    traj = z_traj[..., :STATE_DIM]
    info = {"method": "augmented_neural_ode", "augment_dim": AUGMENT_DIM}
    return (traj, info) if return_all else (traj[-1], info)


# --------------------------- parameter init ----------------------------------
def _xavier_normal(key, fan_in, fan_out, gain=0.1):
    std = gain * jnp.sqrt(2.0 / (fan_in + fan_out))
    # stored as [in, out] so kernels compute x @ W
    return std * jax.random.normal(key, (fan_in, fan_out), dtype=jnp.float32)


def init_params(key):
    dims = [(IN_DIM, HIDDEN_DIM), (HIDDEN_DIM, HIDDEN_DIM),
            (HIDDEN_DIM, HIDDEN_DIM), (HIDDEN_DIM, TOTAL_DIM)]
    keys = jax.random.split(key, len(dims))
    params = []
    for k, (fi, fo) in zip(keys, dims):
        w = _xavier_normal(k, fi, fo)
        bias = jnp.zeros((1, fo), dtype=jnp.float32)                 # nn.init.zeros_
        params.append((w, bias))
    return params


# ------------------------------ references ------------------------------------
def reference_forward(t, z, params, max_norm=MAX_NORM):
    b = z.shape[0]
    t = jnp.asarray(t, dtype=z.dtype)
    if t.ndim == 0:
        t = jnp.broadcast_to(t, (b,))
    if t.ndim == 1:
        t = t[:, None]
    x = jnp.concatenate([z, t], axis=-1)
    (w1, b1), (w2, b2), (w3, b3), (w4, b4) = params
    hp = jax.lax.Precision.HIGHEST
    h = jnp.maximum(jnp.dot(x, w1, precision=hp) + b1, 0.0)
    h = jnp.maximum(jnp.dot(h, w2, precision=hp) + b2, 0.0)
    h = jnp.maximum(jnp.dot(h, w3, precision=hp) + b3, 0.0)
    dz = jnp.dot(h, w4, precision=hp) + b4
    if max_norm > 0.0:
        nrm = jnp.linalg.norm(dz, axis=-1, keepdims=True)
        dz = dz * jnp.minimum(jnp.ones_like(nrm), max_norm / (nrm + 1e-6))
    return dz


def reference_rk4(z0, t_span, params, max_norm=MAX_NORM):
    def step(z, idx):
        t0 = t_span[idx]
        t1 = t_span[idx + 1]
        dt = t1 - t0
        k1 = reference_forward(t0, z, params, max_norm)
        k2 = reference_forward(t0 + 0.5 * dt, z + 0.5 * dt * k1, params, max_norm)
        k3 = reference_forward(t0 + 0.5 * dt, z + 0.5 * dt * k2, params, max_norm)
        k4 = reference_forward(t1, z + dt * k3, params, max_norm)
        z_new = z + (dt / 6.0) * (k1 + 2.0 * k2 + 2.0 * k3 + k4)
        return z_new, z_new

    _, traj = jax.lax.scan(step, z0, jnp.arange(t_span.shape[0] - 1))
    return jnp.concatenate([z0[None], traj], axis=0)


# -------------------------------- main ----------------------------------------
if __name__ == "__main__":
    key = jax.random.PRNGKey(0)
    k_params, k_x0, k_big = jax.random.split(key, 3)
    params = init_params(k_params)

    # --- small demo shapes: batch=8, state_dim=4 -> total_dim=12, hidden=32 ---
    batch = 8
    x0 = jax.random.normal(k_x0, (batch, STATE_DIM), dtype=jnp.float32)
    z0 = jnp.concatenate(
        [x0, jnp.zeros((batch, AUGMENT_DIM), dtype=jnp.float32)], axis=-1)

    # 1) single dynamics eval (the module's forward), scalar t through SMEM
    t = jnp.float32(0.3)
    dz = jax.block_until_ready(augmented_node_forward(t, z0, params))
    dz_ref = reference_forward(t, z0, params)
    assert dz.shape == (batch, TOTAL_DIM)
    assert jnp.allclose(dz, dz_ref, atol=1e-7, rtol=1e-3), \
        float(jnp.max(jnp.abs(dz - dz_ref)))

    # 2) norm-clip branch active (tiny max_norm); approx-reciprocal divide
    dz_c = jax.block_until_ready(
        augmented_node_forward(t, z0, params, max_norm=1e-5))
    dz_c_ref = reference_forward(t, z0, params, max_norm=1e-5)
    assert jnp.allclose(dz_c, dz_c_ref, atol=1e-7, rtol=1e-2), \
        float(jnp.max(jnp.abs(dz_c - dz_c_ref)))

    # 3) fused fixed-step RK4, small batch ([B, F] layout, single time chunk)
    n_steps = 16
    t_span = jnp.linspace(0.0, 1.0, n_steps + 1, dtype=jnp.float32)
    traj = jax.block_until_ready(integrate_rk4(z0, t_span, params))
    traj_ref = reference_rk4(z0, t_span, params)
    assert traj.shape == (n_steps + 1, batch, TOTAL_DIM)
    assert jnp.allclose(traj, traj_ref, atol=2e-5, rtol=1e-3), \
        float(jnp.max(jnp.abs(traj - traj_ref)))

    # 4) integrate() wrapper (augment -> RK4 -> project to state_dim)
    proj, info = integrate(x0, t_span, params)
    proj = jax.block_until_ready(proj)
    assert proj.shape == (n_steps + 1, batch, STATE_DIM)
    assert jnp.allclose(proj, traj_ref[..., :STATE_DIM], atol=2e-5, rtol=1e-3)

    # 5) larger batch -> lane-dense [F, B] layout, 2 batch blocks (megacore path)
    big = 256
    x0b = jax.random.normal(k_big, (big, STATE_DIM), dtype=jnp.float32)
    z0b = jnp.concatenate(
        [x0b, jnp.zeros((big, AUGMENT_DIM), dtype=jnp.float32)], axis=-1)
    n_steps_b = 12
    t_span_b = jnp.linspace(0.0, 0.6, n_steps_b + 1, dtype=jnp.float32)
    traj_b = jax.block_until_ready(integrate_rk4(z0b, t_span_b, params))
    traj_b_ref = reference_rk4(z0b, t_span_b, params)
    assert traj_b.shape == (n_steps_b + 1, big, TOTAL_DIM)
    assert jnp.allclose(traj_b, traj_b_ref, atol=2e-5, rtol=1e-3), \
        float(jnp.max(jnp.abs(traj_b - traj_b_ref)))

    # 6) bf16 MXU inputs (native v6e/v7x path), f32 state/accumulation
    traj_bf = jax.block_until_ready(
        integrate_rk4(z0b, t_span_b, params, use_bf16=True))
    assert jnp.allclose(traj_bf, traj_b_ref, atol=2e-3, rtol=2e-2), \
        float(jnp.max(jnp.abs(traj_bf - traj_b_ref)))

    print("KERNEL_OK")
</pallas_src>

<mosaic_0001>
module attributes {stable_mosaic.version = 11 : i64} {
  func.func @_forward_scalar_t_kernel(%arg0: memref<1xf32, #tpu.memory_space<smem>>, %arg1: memref<8x12xf32, #tpu.memory_space<vmem>>, %arg2: memref<12x32xf32, #tpu.memory_space<vmem>>, %arg3: memref<1x32xf32, #tpu.memory_space<vmem>>, %arg4: memref<1x32xf32, #tpu.memory_space<vmem>>, %arg5: memref<32x32xf32, #tpu.memory_space<vmem>>, %arg6: memref<1x32xf32, #tpu.memory_space<vmem>>, %arg7: memref<32x32xf32, #tpu.memory_space<vmem>>, %arg8: memref<1x32xf32, #tpu.memory_space<vmem>>, %arg9: memref<32x12xf32, #tpu.memory_space<vmem>>, %arg10: memref<1x12xf32, #tpu.memory_space<vmem>>, %arg11: memref<8x12xf32, #tpu.memory_space<vmem>>) attributes {dimension_semantics = [], scalar_prefetch = 0 : i64, scratch_operands = 0 : i64, tpu.core_type = #tpu.core_type<tc>} {
    %c0 = arith.constant 0 : index
    %0 = memref.load %arg0[%c0] : memref<1xf32, #tpu.memory_space<smem>>
    %c0_0 = arith.constant 0 : index
    %c0_1 = arith.constant 0 : index
    %1 = vector.load %arg3[%c0_0, %c0_1] : memref<1x32xf32, #tpu.memory_space<vmem>>, vector<1x32xf32>
    %2 = vector.broadcast %0 : f32 to vector<1x32xf32>
    %3 = arith.mulf %2, %1 : vector<1x32xf32>
    %c0_2 = arith.constant 0 : index
    %c0_3 = arith.constant 0 : index
    %4 = vector.load %arg4[%c0_2, %c0_3] : memref<1x32xf32, #tpu.memory_space<vmem>>, vector<1x32xf32>
    %5 = arith.addf %3, %4 : vector<1x32xf32>
    %c0_4 = arith.constant 0 : index
    %c0_5 = arith.constant 0 : index
    %6 = vector.load %arg1[%c0_4, %c0_5] : memref<8x12xf32, #tpu.memory_space<vmem>>, vector<8x12xf32>
    %c0_6 = arith.constant 0 : index
    %c0_7 = arith.constant 0 : index
    %7 = vector.load %arg2[%c0_6, %c0_7] : memref<12x32xf32, #tpu.memory_space<vmem>>, vector<12x32xf32>
    %c0_8 = arith.constant 0 : index
    %c0_9 = arith.constant 0 : index
    %8 = vector.load %arg5[%c0_8, %c0_9] : memref<32x32xf32, #tpu.memory_space<vmem>>, vector<32x32xf32>
    %c0_10 = arith.constant 0 : index
    %c0_11 = arith.constant 0 : index
    %9 = vector.load %arg6[%c0_10, %c0_11] : memref<1x32xf32, #tpu.memory_space<vmem>>, vector<1x32xf32>
    %c0_12 = arith.constant 0 : index
    %c0_13 = arith.constant 0 : index
    %10 = vector.load %arg7[%c0_12, %c0_13] : memref<32x32xf32, #tpu.memory_space<vmem>>, vector<32x32xf32>
    %c0_14 = arith.constant 0 : index
    %c0_15 = arith.constant 0 : index
    %11 = vector.load %arg8[%c0_14, %c0_15] : memref<1x32xf32, #tpu.memory_space<vmem>>, vector<1x32xf32>
    %c0_16 = arith.constant 0 : index
    %c0_17 = arith.constant 0 : index
    %12 = vector.load %arg9[%c0_16, %c0_17] : memref<32x12xf32, #tpu.memory_space<vmem>>, vector<32x12xf32>
    %c0_18 = arith.constant 0 : index
    %c0_19 = arith.constant 0 : index
    %13 = vector.load %arg10[%c0_18, %c0_19] : memref<1x12xf32, #tpu.memory_space<vmem>>, vector<1x12xf32>
    %cst = arith.constant dense<0.000000e+00> : vector<8x32xf32>
    %14 = tpu.matmul %6, %7, %cst {dimension_numbers = #tpu.dot_dimension_numbers<[1], [0], [0], [1], [0, 0, 1, 1], [], []>} : vector<8x12xf32>, vector<12x32xf32>, vector<8x32xf32> -> vector<8x32xf32>
    %15 = vector.broadcast %5 : vector<1x32xf32> to vector<8x32xf32>
    %16 = arith.addf %14, %15 : vector<8x32xf32>
    %cst_20 = arith.constant 0.000000e+00 : f32
    %17 = vector.broadcast %cst_20 : f32 to vector<8x32xf32>
    %18 = arith.maximumf %16, %17 : vector<8x32xf32>
    %cst_21 = arith.constant dense<0.000000e+00> : vector<8x32xf32>
    %19 = tpu.matmul %18, %8, %cst_21 {dimension_numbers = #tpu.dot_dimension_numbers<[1], [0], [0], [1], [0, 0, 1, 1], [], []>} : vector<8x32xf32>, vector<32x32xf32>, vector<8x32xf32> -> vector<8x32xf32>
    %20 = vector.broadcast %9 : vector<1x32xf32> to vector<8x32xf32>
    %21 = arith.addf %19, %20 : vector<8x32xf32>
    %cst_22 = arith.constant 0.000000e+00 : f32
    %22 = vector.broadcast %cst_22 : f32 to vector<8x32xf32>
    %23 = arith.maximumf %21, %22 : vector<8x32xf32>
    %cst_23 = arith.constant dense<0.000000e+00> : vector<8x32xf32>
    %24 = tpu.matmul %23, %10, %cst_23 {dimension_numbers = #tpu.dot_dimension_numbers<[1], [0], [0], [1], [0, 0, 1, 1], [], []>} : vector<8x32xf32>, vector<32x32xf32>, vector<8x32xf32> -> vector<8x32xf32>
    %25 = vector.broadcast %11 : vector<1x32xf32> to vector<8x32xf32>
    %26 = arith.addf %24, %25 : vector<8x32xf32>
    %cst_24 = arith.constant 0.000000e+00 : f32
    %27 = vector.broadcast %cst_24 : f32 to vector<8x32xf32>
    %28 = arith.maximumf %26, %27 : vector<8x32xf32>
    %cst_25 = arith.constant dense<0.000000e+00> : vector<8x12xf32>
    %29 = tpu.matmul %28, %12, %cst_25 {dimension_numbers = #tpu.dot_dimension_numbers<[1], [0], [0], [1], [0, 0, 1, 1], [], []>} : vector<8x32xf32>, vector<32x12xf32>, vector<8x12xf32> -> vector<8x12xf32>
    %30 = vector.broadcast %13 : vector<1x12xf32> to vector<8x12xf32>
    %31 = arith.addf %29, %30 : vector<8x12xf32>
    %32 = arith.mulf %31, %31 : vector<8x12xf32>
    %cst_26 = arith.constant dense<0.000000e+00> : vector<8xf32>
    %33 = vector.multi_reduction <add>, %32, %cst_26 [1] : vector<8x12xf32> to vector<8xf32>
    %34 = vector.shape_cast %33 : vector<8xf32> to vector<8x1xf32>
    %35 = math.sqrt %34 : vector<8x1xf32>
    %cst_27 = arith.constant 9.99999997E-7 : f32
    %36 = vector.broadcast %cst_27 : f32 to vector<8x1xf32>
    %37 = arith.addf %35, %36 : vector<8x1xf32>
    %38 = tpu.reciprocal %37 {approx = true} : vector<8x1xf32> -> vector<8x1xf32>
    %cst_28 = arith.constant 1.000000e+00 : f32
    %39 = vector.broadcast %cst_28 : f32 to vector<8x1xf32>
    %cst_29 = arith.constant 5.000000e+00 : f32
    %40 = vector.broadcast %cst_29 : f32 to vector<8x1xf32>
    %41 = arith.mulf %40, %38 : vector<8x1xf32>
    %42 = arith.minimumf %39, %41 : vector<8x1xf32>
    %43 = vector.broadcast %42 : vector<8x1xf32> to vector<8x12xf32>
    %44 = arith.mulf %31, %43 : vector<8x12xf32>
    %c0_30 = arith.constant 0 : index
    %c0_31 = arith.constant 0 : index
    %45 = vector.load %arg11[%c0_30, %c0_31] : memref<8x12xf32, #tpu.memory_space<vmem>>, vector<8x12xf32>
    tpu.vector_store %arg11[%c0_30, %c0_31], %44 {strides = array<i32>} : memref<8x12xf32, #tpu.memory_space<vmem>>, vector<8x12xf32>,
    return
  }
}

</mosaic_0001>

<llo_original>
// kernel: tpu_custom_call.1
$region0: #{tpu_custom_call.1}
  #allocation0 [shape = 'u32[]', space=smem, size = 0x4, offset = 0x4, fixed_abs, tag = 'smem constant byte address 0x4 - core index']
  #allocation1 [shape = 'u32[72,128]{1,0:T(1,128)}', space=vmem, size = 0x9000, scoped, tag = 'internal scratch']
  #allocation2 [shape = 'f32[1]{0:T(128)S(6)}', space=smem, size = 0x200, scoped, tag = 'scoped memory for tpu_custom_call.1']
  %s0 = inlined_call_operand.<no memory space> [shape: f32[1], index: 0, kind: input, shape index: {}]
  %s1 = inlined_call_operand.hbm [shape: f32[8,12], index: 1, kind: input, shape index: {}]
  %s2 = inlined_call_operand.vmem [shape: f32[12,32], index: 2, kind: input, shape index: {}]
  %s3 = inlined_call_operand.vmem [shape: f32[1,32], index: 3, kind: input, shape index: {}]
  %s4 = inlined_call_operand.vmem [shape: f32[1,32], index: 4, kind: input, shape index: {}]
  %s5 = inlined_call_operand.vmem [shape: f32[32,32], index: 5, kind: input, shape index: {}]
  %s6 = inlined_call_operand.vmem [shape: f32[1,32], index: 6, kind: input, shape index: {}]
  %s7 = inlined_call_operand.hbm [shape: f32[32,32], index: 7, kind: input, shape index: {}]
  %s8 = inlined_call_operand.vmem [shape: f32[1,32], index: 8, kind: input, shape index: {}]
  %s9 = inlined_call_operand.vmem [shape: f32[32,12], index: 9, kind: input, shape index: {}]
  %s10 = inlined_call_operand.vmem [shape: f32[1,12], index: 10, kind: input, shape index: {}]
  %s11 = inlined_call_operand.hbm [shape: f32[8,12], index: 11, kind: output, shape index: {}]
  %s12 = sld [smem:[#allocation0]]
  $region62: #{tpu_custom_call.1} parent=0
    _
  %s14 = ssub.s32 1, %s12
  %s15 = scalar_select 0, %s14, %s12
  %16 = sst [smem:[#allocation2]] %s0
  $region1: #{tpu_custom_call.1} parent=0
    #allocation3 [shape = 'u8[4096]{0}', space=vmem, size = 0x1000, scoped, tag = 'input window, operand 1, single buffered']
    #allocation4 [shape = 's32[1]{0}', space=sflag, size = 0x4, scoped, tag = 'scoped memory for tpu_custom_call.1']
    #allocation5 [shape = 's32[1]{0}', space=sflag, size = 0x4, scoped, tag = 'scoped memory for tpu_custom_call.1']
    #allocation6 [shape = 'u8[16384]{0}', space=vmem, size = 0x4000, scoped, tag = 'input window, operand 7, single buffered']
    #allocation7 [shape = 's32[1]{0}', space=sflag, size = 0x4, scoped, tag = 'scoped memory for tpu_custom_call.1']
    #allocation8 [shape = 'u8[4096]{0}', space=vmem, size = 0x1000, scoped, tag = 'output window, operand 0, single buffered']
    %17 = vsyncpa [#allocation4], 0
    %18 = vsyncpa [#allocation7], 0
    %19 = vsyncpa [#allocation5], 0
    // Predicated region
    $region2: #{tpu_custom_call.1} parent=1 // pred_check
      _
    $region3: #{tpu_custom_call.1} parent=1 // pred_check_branch
      %21 = sbr.rel (0) target = $region5
    $region4: #{tpu_custom_call.1} parent=1 // pred_region
      _
    $region5: #{tpu_custom_call.1} parent=1 // pred_fallthru
      _
    // Predicated region
    $region6: #{tpu_custom_call.1} parent=1 // pred_check
      _
    $region7: #{tpu_custom_call.1} parent=1 // pred_check_branch
      %23 = sbr.rel (0) target = $region9
    $region8: #{tpu_custom_call.1} parent=1 // pred_region
      %25 = vsyncadd [#allocation4], 0
      %s27 = sshll.u32 %s1, 4
      %s28 = int_to_ptr.hbm [resolvable:$true] %s27
      %s29 = sshll.u32 [#allocation3], 4
      %s30 = int_to_ptr.vmem [resolvable:$true] %s29
      %32 = dma.hbm_to_vmem [thread:$0]  %s28, 128, %s30, [#allocation4]
    $region9: #{tpu_custom_call.1} parent=1 // pred_fallthru
      _
    // Predicated region
    $region10: #{tpu_custom_call.1} parent=1 // pred_check
      _
    $region11: #{tpu_custom_call.1} parent=1 // pred_check_branch
      %34 = sbr.rel (0) target = $region13
    $region12: #{tpu_custom_call.1} parent=1 // pred_region
      _
    $region13: #{tpu_custom_call.1} parent=1 // pred_fallthru
      _
    // Predicated region
    $region14: #{tpu_custom_call.1} parent=1 // pred_check
      _
    $region15: #{tpu_custom_call.1} parent=1 // pred_check_branch
      %36 = sbr.rel (0) target = $region17
    $region16: #{tpu_custom_call.1} parent=1 // pred_region
      _
    $region17: #{tpu_custom_call.1} parent=1 // pred_fallthru
      _
    // Predicated region
    $region18: #{tpu_custom_call.1} parent=1 // pred_check
      _
    $region19: #{tpu_custom_call.1} parent=1 // pred_check_branch
      %38 = sbr.rel (0) target = $region21
    $region20: #{tpu_custom_call.1} parent=1 // pred_region
      _
    $region21: #{tpu_custom_call.1} parent=1 // pred_fallthru
      _
    // Predicated region
    $region22: #{tpu_custom_call.1} parent=1 // pred_check
      _
    $region23: #{tpu_custom_call.1} parent=1 // pred_check_branch
      %40 = sbr.rel (0) target = $region25
    $region24: #{tpu_custom_call.1} parent=1 // pred_region
      _
    $region25: #{tpu_custom_call.1} parent=1 // pred_fallthru
      _
    // Predicated region
    $region26: #{tpu_custom_call.1} parent=1 // pred_check
      _
    $region27: #{tpu_custom_call.1} parent=1 // pred_check_branch
      %42 = sbr.rel (0) target = $region29
    $region28: #{tpu_custom_call.1} parent=1 // pred_region
      _
    $region29: #{tpu_custom_call.1} parent=1 // pred_fallthru
      _
    // Predicated region
    $region30: #{tpu_custom_call.1} parent=1 // pred_check
      _
    $region31: #{tpu_custom_call.1} parent=1 // pred_check_branch
      %44 = sbr.rel (0) target = $region33
    $region32: #{tpu_custom_call.1} parent=1 // pred_region
      %46 = vsyncadd [#allocation7], 0
      %s47 = sshll.u32 %s7, 4
      %s48 = int_to_ptr.hbm [resolvable:$true] %s47
      %s49 = sshll.u32 [#allocation6], 4
      %s50 = int_to_ptr.vmem [resolvable:$true] %s49
      %55 = dma.hbm_to_vmem [thread:$0]  %s48, 512, %s50, [#allocation7], 128, 128, 8
    $region33: #{tpu_custom_call.1} parent=1 // pred_fallthru
      _
    // Predicated region
    $region34: #{tpu_custom_call.1} parent=1 // pred_check
      _
    $region35: #{tpu_custom_call.1} parent=1 // pred_check_branch
      %57 = sbr.rel (0) target = $region37
    $region36: #{tpu_custom_call.1} parent=1 // pred_region
      _
    $region37: #{tpu_custom_call.1} parent=1 // pred_fallthru
      _
    // Predicated region
    $region38: #{tpu_custom_call.1} parent=1 // pred_check
      _
    $region39: #{tpu_custom_call.1} parent=1 // pred_check_branch
      %59 = sbr.rel (0) target = $region41
    $region40: #{tpu_custom_call.1} parent=1 // pred_region
      _
    $region41: #{tpu_custom_call.1} parent=1 // pred_fallthru
      _
    // Predicated region
    $region42: #{tpu_custom_call.1} parent=1 // pred_check
      _
    $region43: #{tpu_custom_call.1} parent=1 // pred_check_branch
      %61 = sbr.rel (0) target = $region45
    $region44: #{tpu_custom_call.1} parent=1 // pred_region
      _
    $region45: #{tpu_custom_call.1} parent=1 // pred_fallthru
      _
    // Predicated region
    $region46: #{tpu_custom_call.1} parent=1 // pred_check
      _
    $region47: #{tpu_custom_call.1} parent=1 // pred_check_branch
      %63 = sbr.rel (0) target = $region49
    $region48: #{tpu_custom_call.1} parent=1 // pred_region
      %65 = dma.done [#allocation4], 128
    $region49: #{tpu_custom_call.1} parent=1 // pred_fallthru
      _
    // Predicated region
    $region50: #{tpu_custom_call.1} parent=1 // pred_check
      _
    $region51: #{tpu_custom_call.1} parent=1 // pred_check_branch
      %67 = sbr.rel (0) target = $region53
    $region52: #{tpu_custom_call.1} parent=1 // pred_region
      %69 = dma.done [#allocation7], 512
    $region53: #{tpu_custom_call.1} parent=1 // pred_fallthru
      _
    %s70 = sld [smem:[#allocation2]]
    %v71 = vld [vmem:[%s3] sm:$0x1]
    %v72 = vstv %s70
    %v73 = vmul.f32 %v72, %v71
    %v74 = vld [vmem:[%s4] sm:$0x1]
    %v75 = vadd.f32 %v73, %v74
    %v76 = vld [vmem:[#allocation3] sm:$0xff]
    %v77 = vld [vmem:[%s2] sm:$0xff]
    %v78 = vld [vmem:[%s2 + $0x8] sm:$0xf]
    %v79 = vld [vmem:[%s5] sm:$0xff]
    %v80 = vld [vmem:[%s5 + $0x8] sm:$0xff]
    %v81 = vld [vmem:[%s5 + $0x10] sm:$0xff]
    %v82 = vld [vmem:[%s5 + $0x18] sm:$0xff]
    %v83 = vld [vmem:[%s6] sm:$0x1]
    %v84 = vld [vmem:[#allocation6] sm:$0xff]
    %v85 = vld [vmem:[#allocation6 + $0x8] sm:$0xff]
    %v86 = vld [vmem:[#allocation6 + $0x10] sm:$0xff]
    %v87 = vld [vmem:[#allocation6 + $0x18] sm:$0xff]
    %v88 = vld [vmem:[%s8] sm:$0x1]
    %v89 = vld [vmem:[%s9] sm:$0xff]
    %v90 = vld [vmem:[%s9 + $0x8] sm:$0xff]
    %v91 = vld [vmem:[%s9 + $0x10] sm:$0xff]
    %v92 = vld [vmem:[%s9 + $0x18] sm:$0xff]
    %v93 = vld [vmem:[%s10] sm:$0x1]
    %v95 = vperm.slane %v75, 0
    %vm97 = vcmask 97280
    %v99 = vsel %vm97, %v76, 0
    %vm101 = vcmask 1043456
    %v103 = vsel %vm101, %v78, 0
    %105 = vmatpush.msra.mxu0 0.0
    %106 = vmatpush.msra.mxu0 0.0
    %107 = vmatpush.msra.mxu0 0.0
    %108 = vmatpush.msra.mxu0 0.0
    %109 = vmatpush.msra.mxu0 0.0
    %110 = vmatpush.msra.mxu0 0.0
    %111 = vmatpush.msra.mxu0 0.0
    %112 = vmatpush.msra.mxu0 0.0
    %113 = vmatpush.msra.mxu0 0.0
    %114 = vmatpush.msra.mxu0 0.0
    %115 = vmatpush.msra.mxu0 0.0
    %116 = vmatpush.msra.mxu0 0.0
    %117 = vmatpush.msra.mxu0 0.0
    %118 = vmatpush.msra.mxu0 0.0
    %119 = vmatpush.msra.mxu0 %v103
    %120 = vmatpush.msra.mxu0 %v77
    %121 = vmatmul.f32.gmra.mxu0 %v99
    %v122 = vpop.f32.mrf.mxu0
    %v123 = vadd.f32 %v95, %v122
    %124 = vdwg.mxu0
    %v125 = vmax.f32 %v123, 0.0
    %v127 = vperm.slane %v83, 0
    %vm129 = vcmask 261120
    %v131 = vsel %vm129, %v125, 0
    %133 = vmatpush.msra.mxu0 0.0
    %134 = vmatpush.msra.mxu0 0.0
    %135 = vmatpush.msra.mxu0 0.0
    %136 = vmatpush.msra.mxu0 0.0
    %137 = vmatpush.msra.mxu0 0.0
    %138 = vmatpush.msra.mxu0 0.0
    %139 = vmatpush.msra.mxu0 0.0
    %140 = vmatpush.msra.mxu0 0.0
    %141 = vmatpush.msra.mxu0 0.0
    %142 = vmatpush.msra.mxu0 0.0
    %143 = vmatpush.msra.mxu0 0.0
    %144 = vmatpush.msra.mxu0 0.0
    %145 = vmatpush.msra.mxu0 %v82
    %146 = vmatpush.msra.mxu0 %v81
    %147 = vmatpush.msra.mxu0 %v80
    %148 = vmatpush.msra.mxu0 %v79
    %149 = vmatmul.f32.gmra.mxu0 %v131
    %v150 = vpop.f32.mrf.mxu0
    %v151 = vadd.f32 %v127, %v150
    %152 = vdwg.mxu0
    %v153 = vmax.f32 %v151, 0.0
    %v155 = vperm.slane %v88, 0
    %v158 = vsel %vm129, %v153, 0
    %160 = vmatpush.msra.mxu0 0.0
    %161 = vmatpush.msra.mxu0 0.0
    %162 = vmatpush.msra.mxu0 0.0
    %163 = vmatpush.msra.mxu0 0.0
    %164 = vmatpush.msra.mxu0 0.0
    %165 = vmatpush.msra.mxu0 0.0
    %166 = vmatpush.msra.mxu0 0.0
    %167 = vmatpush.msra.mxu0 0.0
    %168 = vmatpush.msra.mxu0 0.0
    %169 = vmatpush.msra.mxu0 0.0
    %170 = vmatpush.msra.mxu0 0.0
    %171 = vmatpush.msra.mxu0 0.0
    %172 = vmatpush.msra.mxu0 %v87
    %173 = vmatpush.msra.mxu0 %v86
    %174 = vmatpush.msra.mxu0 %v85
    %175 = vmatpush.msra.mxu0 %v84
    %176 = vmatmul.f32.gmra.mxu0 %v158
    %v177 = vpop.f32.mrf.mxu0
    %v178 = vadd.f32 %v155, %v177
    %179 = vdwg.mxu0
    %v180 = vmax.f32 %v178, 0.0
    %v182 = vperm.slane %v93, 0
    %v185 = vsel %vm129, %v180, 0
    %187 = vmatpush.msra.mxu0 0.0
    %188 = vmatpush.msra.mxu0 0.0
    %189 = vmatpush.msra.mxu0 0.0
    %190 = vmatpush.msra.mxu0 0.0
    %191 = vmatpush.msra.mxu0 0.0
    %192 = vmatpush.msra.mxu0 0.0
    %193 = vmatpush.msra.mxu0 0.0
    %194 = vmatpush.msra.mxu0 0.0
    %195 = vmatpush.msra.mxu0 0.0
    %196 = vmatpush.msra.mxu0 0.0
    %197 = vmatpush.msra.mxu0 0.0
    %198 = vmatpush.msra.mxu0 0.0
    %199 = vmatpush.msra.mxu0 %v92
    %200 = vmatpush.msra.mxu0 %v91
    %201 = vmatpush.msra.mxu0 %v90
    %202 = vmatpush.msra.mxu0 %v89
    %203 = vmatmul.f32.gmra.mxu0 %v185
    %v204 = vpop.f32.mrf.mxu0
    %v205 = vadd.f32 %v182, %v204
    %206 = vdwg.mxu0
    %v207 = vmul.f32 %v205, %v205
    %v208 = vsel %vm97, %v207, 0.0
    %209 = vadd.xlane.f32.xlu0 %v208
    %v210 = vpop.xlane.xlu0 %209
    %v211 = vrsqrt.pop %v210
    %v212 = vmul.f32 %v211, %v210
    %v213 = vmul.f32 %v212, %v211
    %v214 = vmul.f32 0.5, %v213
    %v215 = vsub.f32 1.5, %v214
    %v216 = vmul.f32 %v211, %v215
    %v217 = vmul.f32 %v210, %v216
    %vm218 = vcmp.eq.f32.partialorder %v210, inf
    %v219 = vsel %vm218, %v210, %v217
    %vm220 = vcmp.eq.f32.partialorder %v210, 0.0
    %v221 = vand.u32 %v210, 2147483648
    %v222 = vsel %vm220, %v221, %v219
    %v223 = vadd.f32 %v222, 1e-06
    %v224 = vrcp.pop %v223
    %v225 = vmul.f32 %v224, 5.0
    %v226 = vmin.f32 %v225, 1.0
    %v227 = vmul.f32 %v205, %v226
    %228 = vst.msk [vmem:[#allocation8] sm:$0xff] %vm97, %v227
    // Predicated region
    $region54: #{tpu_custom_call.1} parent=1 // pred_check
      _
    $region55: #{tpu_custom_call.1} parent=1 // pred_check_branch
      %230 = sbr.rel (0) target = $region57
    $region56: #{tpu_custom_call.1} parent=1 // pred_region
      %232 = vsyncadd [#allocation5], 0
      %s234 = sshll.u32 [#allocation8], 4
      %s235 = int_to_ptr.vmem [resolvable:$true] %s234
      %s236 = sshll.u32 %s11, 4
      %s237 = int_to_ptr.hbm [resolvable:$true] %s236
      %239 = dma.vmem_to_hbm [thread:$0]  %s235, 128, %s237, [#allocation5]
    $region57: #{tpu_custom_call.1} parent=1 // pred_fallthru
      _
    // Predicated region
    $region58: #{tpu_custom_call.1} parent=1 // pred_check
      _
    $region59: #{tpu_custom_call.1} parent=1 // pred_check_branch
      %241 = sbr.rel (0) target = $region61
    $region60: #{tpu_custom_call.1} parent=1 // pred_region
      %243 = dma.done [#allocation5], 128
    $region61: #{tpu_custom_call.1} parent=1 // pred_fallthru
      _
    %244 = vsyncpa [#allocation4], 1
    %245 = vsyncpa [#allocation7], 1
    %246 = vsyncpa [#allocation5], 1

</llo_original>
